<compile_context>
chip_gen: v6e
topology: v6e:2x2x1
jax: 0.10.0
libtpu: 0.0.40
codegen_flags: <defaults>
</compile_context>

<pallas_src>
import math
from functools import partial

import jax
import jax.numpy as jnp
import numpy as np
from jax import lax
from jax.experimental import pallas as pl
from jax.experimental.pallas import tpu as pltpu

LOG_2PI = math.log(2.0 * math.pi)
_COMPUTE_DTYPE = jnp.bfloat16   # MXU inputs + tanh on all chips; accumulation stays f32
_FUSE_L2_MAX_WIDTH = 128        # keep block-diag layer-2/3 fusion while 2H <= MXU tile


def _out_width(action_dim: int) -> int:
    # packed slab: [logp_quad | value | mean(A) | zero-pad]; must hold 2 + A columns
    return max(8, ((2 + action_dim + 7) // 8) * 8)


def _choose_tile_b(batch: int, tile_b_max: int = 1024, target_steps: int = 8) -> int:
    """Large tiles for training-scale batches; >= ~8 grid steps for small batches so
    both v7x TensorCores get >= 2 pipelined steps each."""
    t = -(-batch // target_steps)          # ceil(batch / target_steps)
    t = ((t + 7) // 8) * 8                 # sublane-aligned batch tile
    return int(max(8, min(tile_b_max, t)))


# ----------------------------------------------------------------------------
# Pallas kernels
# ----------------------------------------------------------------------------
def _mm_tanh(x, w_ref, b_ref):
    """(x @ W + b) accumulated in f32; tanh evaluated in the bf16 compute dtype."""
    y = jnp.dot(x, w_ref[...], preferred_element_type=jnp.float32) + b_ref[...]
    return jnp.tanh(y.astype(_COMPUTE_DTYPE))


def _make_kernel(with_logp: bool, split_l2: bool, action_dim: int):
    A = action_dim

    def _heads(x, wrefs):
        """Fused actor|critic MLP -> (TB, OUT_W) f32 slab (col1=value, cols 2..2+A=mean)."""
        if not split_l2:
            w1, b1, w2, b2, w3, b3 = wrefs
            h = _mm_tanh(x, w1, b1)                                  # (TB, 2H) bf16
            h = _mm_tanh(h, w2, b2)                                  # (TB, 2H) bf16 (block-diag)
            y = jnp.dot(h, w3[...], preferred_element_type=jnp.float32) + b3[...]
        else:
            w1, b1, w2a, b2a, w2c, b2c, w3a, w3c, b3 = wrefs
            H = w2a.shape[0]
            h = _mm_tanh(x, w1, b1)                                  # (TB, 2H) bf16
            ha = _mm_tanh(h[:, :H], w2a, b2a)                        # actor branch
            hc = _mm_tanh(h[:, H:], w2c, b2c)                        # critic branch
            y = (jnp.dot(ha, w3a[...], preferred_element_type=jnp.float32)
                 + jnp.dot(hc, w3c[...], preferred_element_type=jnp.float32)
                 + b3[...])
        return y                                                     # (TB, OUT_W) f32

    if with_logp:
        def kernel(state_ref, action_ref, *rest):
            *wrefs, nhiv_ref, out_ref = rest
            y = _heads(state_ref[...], wrefs)
            mean = y[:, 2:2 + A]                                     # (TB, A) f32
            diff = action_ref[...] - mean
            # Gaussian log-prob, quadratic part only: sum_d -0.5*(a-mu)^2/std^2
            q = jnp.sum(diff * diff * nhiv_ref[...], axis=-1, keepdims=True)
            lane = lax.broadcasted_iota(jnp.int32, y.shape, 1)
            out_ref[...] = jnp.where(lane == 0, q, y)                # col 0 <- quadratic term
    else:
        def kernel(state_ref, *rest):
            *wrefs, out_ref = rest
            out_ref[...] = _heads(state_ref[...], wrefs)             # greedy: no action DMA / q work
    return kernel


# ----------------------------------------------------------------------------
# Wrapper: weight packing, batch tiling, output unpacking
# ----------------------------------------------------------------------------
@partial(jax.jit, static_argnames=("tile_b", "with_logp"))
def _ppo_forward(state, action, params, tile_b, with_logp):
    B, S = state.shape
    H = params["aw1"].shape[1]
    A = params["aw3"].shape[1]
    OUT_W = _out_width(A)
    assert 2 + A <= OUT_W
    f32, cdt = jnp.float32, _COMPUTE_DTYPE
    split_l2 = (2 * H) > _FUSE_L2_MAX_WIDTH

    # ---- layer 1: fused [actor | critic] ----
    w1 = jnp.concatenate([params["aw1"], params["cw1"]], axis=1).astype(cdt)      # (S, 2H)
    b1 = jnp.concatenate([params["ab1"], params["cb1"]], axis=1).astype(f32)      # (1, 2H)

    # ---- layer 3 baked straight into the packed output layout ----
    b3 = jnp.zeros((1, OUT_W), f32)
    b3 = b3.at[:, 1:2].set(params["cb3"]).at[:, 2:2 + A].set(params["ab3"])       # (1, OUT_W)

    if not split_l2:
        zHH = jnp.zeros((H, H), f32)
        w2 = jnp.concatenate(
            [jnp.concatenate([params["aw2"], zHH], axis=1),
             jnp.concatenate([zHH, params["cw2"]], axis=1)], axis=0).astype(cdt)  # (2H, 2H)
        b2 = jnp.concatenate([params["ab2"], params["cb2"]], axis=1).astype(f32)  # (1, 2H)
        w3 = jnp.zeros((2 * H, OUT_W), f32)
        w3 = w3.at[H:, 1:2].set(params["cw3"]).at[:H, 2:2 + A].set(params["aw3"])
        wargs = [w1, b1, w2, b2, w3.astype(cdt), b3]
    else:
        # 2H exceeds one MXU tile: split layers 2/3 back into actor / critic matmuls
        w2a = params["aw2"].astype(cdt); b2a = params["ab2"].astype(f32)
        w2c = params["cw2"].astype(cdt); b2c = params["cb2"].astype(f32)
        w3a = jnp.zeros((H, OUT_W), f32).at[:, 2:2 + A].set(params["aw3"]).astype(cdt)
        w3c = jnp.zeros((H, OUT_W), f32).at[:, 1:2].set(params["cw3"]).astype(cdt)
        wargs = [w1, b1, w2a, b2a, w2c, b2c, w3a, w3c, b3]

    # ---- batch tiling / padding ----
    n_blocks = pl.cdiv(B, tile_b)
    Bp = n_blocks * tile_b
    x = state.astype(cdt)
    if Bp != B:
        x = jnp.pad(x, ((0, Bp - B), (0, 0)))

    def batch_spec(feat):
        return pl.BlockSpec((tile_b, feat), lambda i: (i, 0))

    def rep(a):  # parameters: same (full) block for every grid step
        return pl.BlockSpec(a.shape, lambda i: (0, 0))

    in_args, in_specs = [x], [batch_spec(S)]
    if with_logp:
        act = action.astype(f32)
        if Bp != B:
            act = jnp.pad(act, ((0, Bp - B), (0, 0)))
        in_args.append(act)
        in_specs.append(batch_spec(A))
    in_args += wargs
    in_specs += [rep(a) for a in wargs]

    if with_logp:
        log_std = params["log_std"].astype(f32)                   # (1, A)
        nhalf_inv_var = -0.5 * jnp.exp(-2.0 * log_std)            # hoisted: -0.5/var
        in_args.append(nhalf_inv_var)
        in_specs.append(rep(nhalf_inv_var))

    packed = pl.pallas_call(
        _make_kernel(with_logp, split_l2, A),
        grid=(n_blocks,),
        in_specs=in_specs,
        out_specs=pl.BlockSpec((tile_b, OUT_W), lambda i: (i, 0)),
        out_shape=jax.ShapeDtypeStruct((Bp, OUT_W), jnp.float32),
        compiler_params=pltpu.CompilerParams(dimension_semantics=("parallel",)),
    )(*in_args)

    packed = packed[:B]
    values = packed[:, 1:2]                                       # (B, 1)
    mean = packed[:, 2:2 + A]                                     # (B, A)
    if not with_logp:
        return values, mean

    log_std = params["log_std"].astype(f32)
    logp = packed[:, 0] + jnp.sum(-log_std - 0.5 * LOG_2PI)       # (B,)
    entropy = jnp.broadcast_to(jnp.sum(0.5 + 0.5 * LOG_2PI + log_std), (B,))
    return logp, values, entropy, mean


def ppo_evaluate(state, action, params, tile_b=None):
    """Fused PPO evaluate: (action_log_probs, state_values, dist_entropy, action_mean)."""
    tile_b = _choose_tile_b(state.shape[0]) if tile_b is None else max(8, ((tile_b + 7) // 8) * 8)
    return _ppo_forward(state, action, params, tile_b, True)


def ppo_act_greedy(state, params, tile_b=None):
    """Greedy act(): action = actor mean; log-prob at the mean is the closed-form constant."""
    B = state.shape[0]
    tile_b = _choose_tile_b(B) if tile_b is None else max(8, ((tile_b + 7) // 8) * 8)
    _, mean = _ppo_forward(state, None, params, tile_b, False)
    log_std = jnp.asarray(params["log_std"], jnp.float32)
    logp = jnp.broadcast_to(jnp.sum(-log_std - 0.5 * LOG_2PI), (B,))
    return mean, logp
    # TODO(synk): stochastic (non-greedy) act() would need Normal sampling (pltpu.prng_*) in-kernel.


# ----------------------------------------------------------------------------
# Deterministic parameter init + pure-JAX reference
# ----------------------------------------------------------------------------
def init_params(key, state_dim, action_dim, hidden, action_std_init):
    ks = jax.random.split(key, 12)
    scale = 0.1
    return {
        "aw1": scale * jax.random.normal(ks[0], (state_dim, hidden), jnp.float32),
        "ab1": scale * jax.random.normal(ks[1], (1, hidden), jnp.float32),
        "aw2": scale * jax.random.normal(ks[2], (hidden, hidden), jnp.float32),
        "ab2": scale * jax.random.normal(ks[3], (1, hidden), jnp.float32),
        "aw3": scale * jax.random.normal(ks[4], (hidden, action_dim), jnp.float32),
        "ab3": scale * jax.random.normal(ks[5], (1, action_dim), jnp.float32),
        "cw1": scale * jax.random.normal(ks[6], (state_dim, hidden), jnp.float32),
        "cb1": scale * jax.random.normal(ks[7], (1, hidden), jnp.float32),
        "cw2": scale * jax.random.normal(ks[8], (hidden, hidden), jnp.float32),
        "cb2": scale * jax.random.normal(ks[9], (1, hidden), jnp.float32),
        "cw3": scale * jax.random.normal(ks[10], (hidden, 1), jnp.float32),
        "cb3": scale * jax.random.normal(ks[11], (1, 1), jnp.float32),
        "log_std": jnp.full((1, action_dim), math.log(action_std_init), jnp.float32),
    }


def ref_evaluate(state, action, p):
    h = jnp.tanh(state @ p["aw1"] + p["ab1"])
    h = jnp.tanh(h @ p["aw2"] + p["ab2"])
    mean = h @ p["aw3"] + p["ab3"]
    c = jnp.tanh(state @ p["cw1"] + p["cb1"])
    c = jnp.tanh(c @ p["cw2"] + p["cb2"])
    v = c @ p["cw3"] + p["cb3"]
    log_std = p["log_std"]
    var = jnp.exp(2.0 * log_std)
    logp = jnp.sum(-0.5 * (action - mean) ** 2 / var - log_std - 0.5 * LOG_2PI, axis=-1)
    ent = jnp.sum(0.5 + 0.5 * LOG_2PI + log_std) * jnp.ones((state.shape[0],), jnp.float32)
    return logp, v, ent, mean


# ----------------------------------------------------------------------------
if __name__ == "__main__":
    STATE_DIM, ACTION_DIM, HIDDEN = 8, 4, 32
    ACTION_STD_INIT = 0.6
    BATCH = 512

    key = jax.random.PRNGKey(0)
    kp, ks, ka = jax.random.split(key, 3)
    params = init_params(kp, STATE_DIM, ACTION_DIM, HIDDEN, ACTION_STD_INIT)

    state = jax.random.normal(ks, (BATCH, STATE_DIM), jnp.float32)
    action = jax.random.normal(ka, (BATCH, ACTION_DIM), jnp.float32)

    # fused-layer-2 path (2H = 64 <= 128)
    logp, values, entropy, mean = ppo_evaluate(state, action, params)
    jax.block_until_ready((logp, values, entropy, mean))

    r_logp, r_val, r_ent, r_mean = ref_evaluate(state, action, params)
    np.testing.assert_allclose(np.asarray(logp), np.asarray(r_logp), rtol=2e-2, atol=2e-2)
    np.testing.assert_allclose(np.asarray(values), np.asarray(r_val), rtol=2e-2, atol=2e-2)
    np.testing.assert_allclose(np.asarray(entropy), np.asarray(r_ent), rtol=2e-2, atol=2e-2)
    np.testing.assert_allclose(np.asarray(mean), np.asarray(r_mean), rtol=2e-2, atol=2e-2)

    # non-multiple-of-tile batch exercises the padding path
    logp_s, val_s, ent_s, mean_s = ppo_evaluate(state[:100], action[:100], params)
    jax.block_until_ready((logp_s, val_s, ent_s, mean_s))
    np.testing.assert_allclose(np.asarray(logp_s), np.asarray(r_logp[:100]), rtol=2e-2, atol=2e-2)
    np.testing.assert_allclose(np.asarray(mean_s), np.asarray(r_mean[:100]), rtol=2e-2, atol=2e-2)

    # greedy act(): log-prob-free kernel variant + closed-form constant
    g_action, g_logp = ppo_act_greedy(state, params)
    jax.block_until_ready((g_action, g_logp))
    np.testing.assert_allclose(np.asarray(g_action), np.asarray(r_mean), rtol=2e-2, atol=2e-2)
    g_logp_ref = -(np.sum(np.asarray(params["log_std"])) + 0.5 * ACTION_DIM * LOG_2PI)
    np.testing.assert_allclose(np.asarray(g_logp), np.full((BATCH,), g_logp_ref), rtol=2e-2, atol=2e-2)

    # split-layer-2 path (2H = 256 > 128): separate actor/critic layer-2/3 matmuls
    params_big = init_params(kp, STATE_DIM, ACTION_DIM, 128, ACTION_STD_INIT)
    sb, ab = state[:64], action[:64]
    logp_b, val_b, ent_b, mean_b = ppo_evaluate(sb, ab, params_big)
    jax.block_until_ready((logp_b, val_b, ent_b, mean_b))
    rb_logp, rb_val, rb_ent, rb_mean = ref_evaluate(sb, ab, params_big)
    np.testing.assert_allclose(np.asarray(logp_b), np.asarray(rb_logp), rtol=3e-2, atol=3e-2)
    np.testing.assert_allclose(np.asarray(val_b), np.asarray(rb_val), rtol=3e-2, atol=3e-2)
    np.testing.assert_allclose(np.asarray(mean_b), np.asarray(rb_mean), rtol=3e-2, atol=3e-2)

    print("KERNEL_OK")
</pallas_src>

<mosaic_0001>
module attributes {stable_mosaic.version = 11 : i64} {
  func.func @kernel(%arg0: i32, %arg1: memref<64x8xbf16, #tpu.memory_space<vmem>>, %arg2: memref<64x4xf32, #tpu.memory_space<vmem>>, %arg3: memref<8x64xbf16, #tpu.memory_space<vmem>>, %arg4: memref<1x64xf32, #tpu.memory_space<vmem>>, %arg5: memref<64x64xbf16, #tpu.memory_space<vmem>>, %arg6: memref<1x64xf32, #tpu.memory_space<vmem>>, %arg7: memref<64x8xbf16, #tpu.memory_space<vmem>>, %arg8: memref<1x8xf32, #tpu.memory_space<vmem>>, %arg9: memref<1x4xf32, #tpu.memory_space<vmem>>, %arg10: memref<64x8xf32, #tpu.memory_space<vmem>>) attributes {dimension_semantics = [#tpu.dimension_semantics<parallel>], iteration_bounds = array<i64: 8>, scalar_prefetch = 0 : i64, scratch_operands = 0 : i64, tpu.core_type = #tpu.core_type<tc>, window_params = [{transform_indices = @transform_0, window_bounds = array<i64: 64, 8>}, {transform_indices = @transform_1, window_bounds = array<i64: 64, 4>}, {pipeline_mode = #tpu.pipeline_mode<synchronous>, transform_indices = @transform_2, window_bounds = array<i64: 8, 64>}, {pipeline_mode = #tpu.pipeline_mode<synchronous>, transform_indices = @transform_3, window_bounds = array<i64: 1, 64>}, {pipeline_mode = #tpu.pipeline_mode<synchronous>, transform_indices = @transform_4, window_bounds = array<i64: 64, 64>}, {pipeline_mode = #tpu.pipeline_mode<synchronous>, transform_indices = @transform_5, window_bounds = array<i64: 1, 64>}, {pipeline_mode = #tpu.pipeline_mode<synchronous>, transform_indices = @transform_6, window_bounds = array<i64: 64, 8>}, {pipeline_mode = #tpu.pipeline_mode<synchronous>, transform_indices = @transform_7, window_bounds = array<i64: 1, 8>}, {pipeline_mode = #tpu.pipeline_mode<synchronous>, transform_indices = @transform_8, window_bounds = array<i64: 1, 4>}, {transform_indices = @transform_9, window_bounds = array<i64: 64, 8>}]} {
    %c0 = arith.constant 0 : index
    %c0_0 = arith.constant 0 : index
    %0 = vector.load %arg1[%c0, %c0_0] : memref<64x8xbf16, #tpu.memory_space<vmem>>, vector<64x8xbf16>
    %c0_1 = arith.constant 0 : index
    %c0_2 = arith.constant 0 : index
    %1 = vector.load %arg3[%c0_1, %c0_2] : memref<8x64xbf16, #tpu.memory_space<vmem>>, vector<8x64xbf16>
    %cst = arith.constant dense<0.000000e+00> : vector<64x64xf32>
    %2 = tpu.matmul %0, %1, %cst {dimension_numbers = #tpu.dot_dimension_numbers<[1], [0], [0], [1], [0, 0, 1, 1], [], []>} : vector<64x8xbf16>, vector<8x64xbf16>, vector<64x64xf32> -> vector<64x64xf32>
    %c0_3 = arith.constant 0 : index
    %c0_4 = arith.constant 0 : index
    %3 = vector.load %arg4[%c0_3, %c0_4] : memref<1x64xf32, #tpu.memory_space<vmem>>, vector<1x64xf32>
    %4 = vector.broadcast %3 : vector<1x64xf32> to vector<64x64xf32>
    %5 = arith.addf %2, %4 : vector<64x64xf32>
    %6 = arith.truncf %5 : vector<64x64xf32> to vector<64x64xbf16>
    %7 = math.tanh %6 : vector<64x64xbf16>
    %c0_5 = arith.constant 0 : index
    %c0_6 = arith.constant 0 : index
    %8 = vector.load %arg5[%c0_5, %c0_6] : memref<64x64xbf16, #tpu.memory_space<vmem>>, vector<64x64xbf16>
    %cst_7 = arith.constant dense<0.000000e+00> : vector<64x64xf32>
    %9 = tpu.matmul %7, %8, %cst_7 {dimension_numbers = #tpu.dot_dimension_numbers<[1], [0], [0], [1], [0, 0, 1, 1], [], []>} : vector<64x64xbf16>, vector<64x64xbf16>, vector<64x64xf32> -> vector<64x64xf32>
    %c0_8 = arith.constant 0 : index
    %c0_9 = arith.constant 0 : index
    %10 = vector.load %arg6[%c0_8, %c0_9] : memref<1x64xf32, #tpu.memory_space<vmem>>, vector<1x64xf32>
    %11 = vector.broadcast %10 : vector<1x64xf32> to vector<64x64xf32>
    %12 = arith.addf %9, %11 : vector<64x64xf32>
    %13 = arith.truncf %12 : vector<64x64xf32> to vector<64x64xbf16>
    %14 = math.tanh %13 : vector<64x64xbf16>
    %c0_10 = arith.constant 0 : index
    %c0_11 = arith.constant 0 : index
    %15 = vector.load %arg7[%c0_10, %c0_11] : memref<64x8xbf16, #tpu.memory_space<vmem>>, vector<64x8xbf16>
    %cst_12 = arith.constant dense<0.000000e+00> : vector<64x8xf32>
    %16 = tpu.matmul %14, %15, %cst_12 {dimension_numbers = #tpu.dot_dimension_numbers<[1], [0], [0], [1], [0, 0, 1, 1], [], []>} : vector<64x64xbf16>, vector<64x8xbf16>, vector<64x8xf32> -> vector<64x8xf32>
    %c0_13 = arith.constant 0 : index
    %c0_14 = arith.constant 0 : index
    %17 = vector.load %arg8[%c0_13, %c0_14] : memref<1x8xf32, #tpu.memory_space<vmem>>, vector<1x8xf32>
    %18 = vector.broadcast %17 : vector<1x8xf32> to vector<64x8xf32>
    %19 = arith.addf %16, %18 : vector<64x8xf32>
    %20 = vector.extract_strided_slice %19 {offsets = [0, 2], sizes = [64, 4], strides = [1, 1]} : vector<64x8xf32> to vector<64x4xf32>
    %c0_15 = arith.constant 0 : index
    %c0_16 = arith.constant 0 : index
    %21 = vector.load %arg2[%c0_15, %c0_16] : memref<64x4xf32, #tpu.memory_space<vmem>>, vector<64x4xf32>
    %22 = arith.subf %21, %20 : vector<64x4xf32>
    %23 = arith.mulf %22, %22 : vector<64x4xf32>
    %c0_17 = arith.constant 0 : index
    %c0_18 = arith.constant 0 : index
    %24 = vector.load %arg9[%c0_17, %c0_18] : memref<1x4xf32, #tpu.memory_space<vmem>>, vector<1x4xf32>
    %25 = vector.broadcast %24 : vector<1x4xf32> to vector<64x4xf32>
    %26 = arith.mulf %23, %25 : vector<64x4xf32>
    %cst_19 = arith.constant dense<0.000000e+00> : vector<64xf32>
    %27 = vector.multi_reduction <add>, %26, %cst_19 [1] : vector<64x4xf32> to vector<64xf32>
    %28 = vector.shape_cast %27 : vector<64xf32> to vector<64x1xf32>
    %29 = tpu.iota {dimensions = array<i32: 1>} : vector<64x8xi32>
    %c0_i32 = arith.constant 0 : i32
    %30 = vector.broadcast %c0_i32 : i32 to vector<64x8xi32>
    %31 = arith.cmpi eq, %29, %30 : vector<64x8xi32>
    %32 = vector.shape_cast %28 : vector<64x1xf32> to vector<64x1xf32>
    %33 = vector.broadcast %32 : vector<64x1xf32> to vector<64x8xf32>
    %34 = arith.select %31, %33, %19 : vector<64x8xi1>, vector<64x8xf32>
    %c0_20 = arith.constant 0 : index
    %c0_21 = arith.constant 0 : index
    %35 = vector.load %arg10[%c0_20, %c0_21] : memref<64x8xf32, #tpu.memory_space<vmem>>, vector<64x8xf32>
    tpu.vector_store %arg10[%c0_20, %c0_21], %34 {strides = array<i32>} : memref<64x8xf32, #tpu.memory_space<vmem>>, vector<64x8xf32>,
    return
  }
  func.func @transform_0(%arg0: i32) -> (i32, i32) {
    %c0_i32 = arith.constant 0 : i32
    %c0_i32_0 = arith.constant 0 : i32
    return %arg0, %c0_i32 : i32, i32
  }
  func.func @transform_1(%arg0: i32) -> (i32, i32) {
    %c0_i32 = arith.constant 0 : i32
    %c0_i32_0 = arith.constant 0 : i32
    return %arg0, %c0_i32 : i32, i32
  }
  func.func @transform_2(%arg0: i32) -> (i32, i32) {
    %c0_i32 = arith.constant 0 : i32
    %c0_i32_0 = arith.constant 0 : i32
    %c0_i32_1 = arith.constant 0 : i32
    return %c0_i32, %c0_i32_0 : i32, i32
  }
  func.func @transform_3(%arg0: i32) -> (i32, i32) {
    %c0_i32 = arith.constant 0 : i32
    %c0_i32_0 = arith.constant 0 : i32
    %c0_i32_1 = arith.constant 0 : i32
    return %c0_i32, %c0_i32_0 : i32, i32
  }
  func.func @transform_4(%arg0: i32) -> (i32, i32) {
    %c0_i32 = arith.constant 0 : i32
    %c0_i32_0 = arith.constant 0 : i32
    %c0_i32_1 = arith.constant 0 : i32
    return %c0_i32, %c0_i32_0 : i32, i32
  }
  func.func @transform_5(%arg0: i32) -> (i32, i32) {
    %c0_i32 = arith.constant 0 : i32
    %c0_i32_0 = arith.constant 0 : i32
    %c0_i32_1 = arith.constant 0 : i32
    return %c0_i32, %c0_i32_0 : i32, i32
  }
  func.func @transform_6(%arg0: i32) -> (i32, i32) {
    %c0_i32 = arith.constant 0 : i32
    %c0_i32_0 = arith.constant 0 : i32
    %c0_i32_1 = arith.constant 0 : i32
    return %c0_i32, %c0_i32_0 : i32, i32
  }
  func.func @transform_7(%arg0: i32) -> (i32, i32) {
    %c0_i32 = arith.constant 0 : i32
    %c0_i32_0 = arith.constant 0 : i32
    %c0_i32_1 = arith.constant 0 : i32
    return %c0_i32, %c0_i32_0 : i32, i32
  }
  func.func @transform_8(%arg0: i32) -> (i32, i32) {
    %c0_i32 = arith.constant 0 : i32
    %c0_i32_0 = arith.constant 0 : i32
    %c0_i32_1 = arith.constant 0 : i32
    return %c0_i32, %c0_i32_0 : i32, i32
  }
  func.func @transform_9(%arg0: i32) -> (i32, i32) {
    %c0_i32 = arith.constant 0 : i32
    %c0_i32_0 = arith.constant 0 : i32
    return %arg0, %c0_i32 : i32, i32
  }
}

</mosaic_0001>

<llo_original>
// kernel: _ppo_forward.1
$region0: #{_ppo_forward.1}
  #allocation0 [shape = 'u32[]', space=smem, size = 0x4, offset = 0x4, fixed_abs, tag = 'smem constant byte address 0x4 - core index']
  #allocation1 [shape = 'u32[144,128]{1,0:T(1,128)}', space=vmem, size = 0x12000, scoped, tag = 'internal scratch']
  %s0 = inlined_call_operand.vmem [shape: bf16[512,8], index: 0, kind: input, shape index: {}]
  %s1 = inlined_call_operand.vmem [shape: f32[512,4], index: 1, kind: input, shape index: {}]
  %s2 = inlined_call_operand.vmem [shape: bf16[8,64], index: 2, kind: input, shape index: {}]
  %s3 = inlined_call_operand.vmem [shape: f32[1,64], index: 3, kind: input, shape index: {}]
  %s4 = inlined_call_operand.vmem [shape: bf16[64,64], index: 4, kind: input, shape index: {}]
  %s5 = inlined_call_operand.vmem [shape: f32[1,64], index: 5, kind: input, shape index: {}]
  %s6 = inlined_call_operand.vmem [shape: bf16[64,8], index: 6, kind: input, shape index: {}]
  %s7 = inlined_call_operand.vmem [shape: f32[1,8], index: 7, kind: input, shape index: {}]
  %s8 = inlined_call_operand.vmem [shape: f32[1,4], index: 8, kind: input, shape index: {}]
  %s9 = inlined_call_operand.vmem [shape: f32[512,8], index: 9, kind: output, shape index: {}]
  %s10 = sld [smem:[#allocation0]]
  $region69: #{_ppo_forward.1} parent=0
    _
  %s12 = ssub.s32 1, %s10
  %s13 = scalar_select 0, %s12, %s10
  loop: start=0, step=1, limit=10
  $region2: #{_ppo_forward.1} parent=0 // loop_pre_header
    _
  $region3: #{_ppo_forward.1} parent=0 // loop_header
    %s15 = sphi 0, %s19
    %p16 = scmp.ge.s32.totalorder %s15, 10
    %s25 = sphi 0, %s27
    %s28 = sphi 0, %s25
    %s29 = sphi 0, %s28
    %s45 = sphi 0, %s29
    %s51 = sphi 0, %s53
    %s54 = sphi 0, %s51
    %s55 = sphi 0, %s54
    %s71 = sphi 0, %s55
    %s75 = sphi 0, %s75
    %s77 = sphi 0, %s75
    %s78 = sphi 0, %s77
    %s92 = sphi 0, %s78
    %s96 = sphi 0, %s96
    %s98 = sphi 0, %s96
    %s99 = sphi 0, %s98
    %s113 = sphi 0, %s99
    %s117 = sphi 0, %s117
    %s119 = sphi 0, %s117
    %s120 = sphi 0, %s119
    %s134 = sphi 0, %s120
    %s138 = sphi 0, %s138
    %s140 = sphi 0, %s138
    %s141 = sphi 0, %s140
    %s155 = sphi 0, %s141
    %s159 = sphi 0, %s159
    %s161 = sphi 0, %s159
    %s162 = sphi 0, %s161
    %s176 = sphi 0, %s162
    %s180 = sphi 0, %s180
    %s182 = sphi 0, %s180
    %s183 = sphi 0, %s182
    %s197 = sphi 0, %s183
    %s201 = sphi 0, %s201
    %s203 = sphi 0, %s201
    %s204 = sphi 0, %s203
    %s218 = sphi 0, %s204
    %s224 = sphi 0, %s226
    %s227 = sphi 0, %s224
    %s228 = sphi 0, %s227
    %s244 = sphi 0, %s228
  $region4: #{_ppo_forward.1} parent=0 // loop_header_branch
    %18 = sbr.rel (%p16) target = $region8
  $region5: #{_ppo_forward.1} parent=0 // loop_body
    %s20 = ssub.s32 %s15, 1
    %s21 = ssub.s32 %s15, 2
    %s22 = sadd.s32 %s15, 1
    %s23 = ssub.s32 %s15, %s22
    %p24 = scmp.eq.s32.totalorder %s23, 0
    %s26 = sadd.s32 %s25, 1
    %s27 = scalar_select %p24, %s25, %s26
    %p30 = pneg %p24
    %p31 = scmp.eq.s32.totalorder %s15, 7
    %p32 = por %p30, %p31
    %p33 = scmp.ne.s32.totalorder %s25, %s28
    %p34 = scmp.eq.s32.totalorder %s15, 0
    %p35 = por %p33, %p34
    %p36 = scmp.ne.s32.totalorder %s25, %s28
    %p37 = scmp.eq.s32.totalorder %s20, 7
    %p38 = por %p36, %p37
    %p39 = scmp.ne.s32.totalorder %s28, %s29
    %p40 = scmp.eq.s32.totalorder %s20, 0
    %p41 = por %p39, %p40
    %p42 = scmp.ne.s32.totalorder %s28, %s29
    %p43 = scmp.eq.s32.totalorder %s21, 7
    %p44 = por %p42, %p43
    %p46 = scmp.ne.s32.totalorder %s29, %s45
    %p47 = scmp.eq.s32.totalorder %s21, 0
    %p48 = por %p46, %p47
    %s49 = ssub.s32 %s15, %s22
    %p50 = scmp.eq.s32.totalorder %s49, 0
    %s52 = sadd.s32 %s51, 1
    %s53 = scalar_select %p50, %s51, %s52
    %p56 = pneg %p50
    %p57 = scmp.eq.s32.totalorder %s15, 7
    %p58 = por %p56, %p57
    %p59 = scmp.ne.s32.totalorder %s51, %s54
    %p60 = scmp.eq.s32.totalorder %s15, 0
    %p61 = por %p59, %p60
    %p62 = scmp.ne.s32.totalorder %s51, %s54
    %p63 = scmp.eq.s32.totalorder %s20, 7
    %p64 = por %p62, %p63
    %p65 = scmp.ne.s32.totalorder %s54, %s55
    %p66 = scmp.eq.s32.totalorder %s20, 0
    %p67 = por %p65, %p66
    %p68 = scmp.ne.s32.totalorder %s54, %s55
    %p69 = scmp.eq.s32.totalorder %s21, 7
    %p70 = por %p68, %p69
    %p72 = scmp.ne.s32.totalorder %s55, %s71
    %p73 = scmp.eq.s32.totalorder %s21, 0
    %p74 = por %p72, %p73
    %s76 = sadd.s32 %s75, 1
    %p79 = scmp.eq.s32.totalorder %s15, 7
    %p80 = scmp.ne.s32.totalorder %s75, %s77
    %p81 = scmp.eq.s32.totalorder %s15, 0
    %p82 = por %p80, %p81
    %p83 = scmp.ne.s32.totalorder %s75, %s77
    %p84 = scmp.eq.s32.totalorder %s20, 7
    %p85 = por %p83, %p84
    %p86 = scmp.ne.s32.totalorder %s77, %s78
    %p87 = scmp.eq.s32.totalorder %s20, 0
    %p88 = por %p86, %p87
    %p89 = scmp.ne.s32.totalorder %s77, %s78
    %p90 = scmp.eq.s32.totalorder %s21, 7
    %p91 = por %p89, %p90
    %p93 = scmp.ne.s32.totalorder %s78, %s92
    %p94 = scmp.eq.s32.totalorder %s21, 0
    %p95 = por %p93, %p94
    %s97 = sadd.s32 %s96, 1
    %p100 = scmp.eq.s32.totalorder %s15, 7
    %p101 = scmp.ne.s32.totalorder %s96, %s98
    %p102 = scmp.eq.s32.totalorder %s15, 0
    %p103 = por %p101, %p102
    %p104 = scmp.ne.s32.totalorder %s96, %s98
    %p105 = scmp.eq.s32.totalorder %s20, 7
    %p106 = por %p104, %p105
    %p107 = scmp.ne.s32.totalorder %s98, %s99
    %p108 = scmp.eq.s32.totalorder %s20, 0
    %p109 = por %p107, %p108
    %p110 = scmp.ne.s32.totalorder %s98, %s99
    %p111 = scmp.eq.s32.totalorder %s21, 7
    %p112 = por %p110, %p111
    %p114 = scmp.ne.s32.totalorder %s99, %s113
    %p115 = scmp.eq.s32.totalorder %s21, 0
    %p116 = por %p114, %p115
    %s118 = sadd.s32 %s117, 1
    %p121 = scmp.eq.s32.totalorder %s15, 7
    %p122 = scmp.ne.s32.totalorder %s117, %s119
    %p123 = scmp.eq.s32.totalorder %s15, 0
    %p124 = por %p122, %p123
    %p125 = scmp.ne.s32.totalorder %s117, %s119
    %p126 = scmp.eq.s32.totalorder %s20, 7
    %p127 = por %p125, %p126
    %p128 = scmp.ne.s32.totalorder %s119, %s120
    %p129 = scmp.eq.s32.totalorder %s20, 0
    %p130 = por %p128, %p129
    %p131 = scmp.ne.s32.totalorder %s119, %s120
    %p132 = scmp.eq.s32.totalorder %s21, 7
    %p133 = por %p131, %p132
    %p135 = scmp.ne.s32.totalorder %s120, %s134
    %p136 = scmp.eq.s32.totalorder %s21, 0
    %p137 = por %p135, %p136
    %s139 = sadd.s32 %s138, 1
    %p142 = scmp.eq.s32.totalorder %s15, 7
    %p143 = scmp.ne.s32.totalorder %s138, %s140
    %p144 = scmp.eq.s32.totalorder %s15, 0
    %p145 = por %p143, %p144
    %p146 = scmp.ne.s32.totalorder %s138, %s140
    %p147 = scmp.eq.s32.totalorder %s20, 7
    %p148 = por %p146, %p147
    %p149 = scmp.ne.s32.totalorder %s140, %s141
    %p150 = scmp.eq.s32.totalorder %s20, 0
    %p151 = por %p149, %p150
    %p152 = scmp.ne.s32.totalorder %s140, %s141
    %p153 = scmp.eq.s32.totalorder %s21, 7
    %p154 = por %p152, %p153
    %p156 = scmp.ne.s32.totalorder %s141, %s155
    %p157 = scmp.eq.s32.totalorder %s21, 0
    %p158 = por %p156, %p157
    %s160 = sadd.s32 %s159, 1
    %p163 = scmp.eq.s32.totalorder %s15, 7
    %p164 = scmp.ne.s32.totalorder %s159, %s161
    %p165 = scmp.eq.s32.totalorder %s15, 0
    %p166 = por %p164, %p165
    %p167 = scmp.ne.s32.totalorder %s159, %s161
    %p168 = scmp.eq.s32.totalorder %s20, 7
    %p169 = por %p167, %p168
    %p170 = scmp.ne.s32.totalorder %s161, %s162
    %p171 = scmp.eq.s32.totalorder %s20, 0
    %p172 = por %p170, %p171
    %p173 = scmp.ne.s32.totalorder %s161, %s162
    %p174 = scmp.eq.s32.totalorder %s21, 7
    %p175 = por %p173, %p174
    %p177 = scmp.ne.s32.totalorder %s162, %s176
    %p178 = scmp.eq.s32.totalorder %s21, 0
    %p179 = por %p177, %p178
    %s181 = sadd.s32 %s180, 1
    %p184 = scmp.eq.s32.totalorder %s15, 7
    %p185 = scmp.ne.s32.totalorder %s180, %s182
    %p186 = scmp.eq.s32.totalorder %s15, 0
    %p187 = por %p185, %p186
    %p188 = scmp.ne.s32.totalorder %s180, %s182
    %p189 = scmp.eq.s32.totalorder %s20, 7
    %p190 = por %p188, %p189
    %p191 = scmp.ne.s32.totalorder %s182, %s183
    %p192 = scmp.eq.s32.totalorder %s20, 0
    %p193 = por %p191, %p192
    %p194 = scmp.ne.s32.totalorder %s182, %s183
    %p195 = scmp.eq.s32.totalorder %s21, 7
    %p196 = por %p194, %p195
    %p198 = scmp.ne.s32.totalorder %s183, %s197
    %p199 = scmp.eq.s32.totalorder %s21, 0
    %p200 = por %p198, %p199
    %s202 = sadd.s32 %s201, 1
    %p205 = scmp.eq.s32.totalorder %s15, 7
    %p206 = scmp.ne.s32.totalorder %s201, %s203
    %p207 = scmp.eq.s32.totalorder %s15, 0
    %p208 = por %p206, %p207
    %p209 = scmp.ne.s32.totalorder %s201, %s203
    %p210 = scmp.eq.s32.totalorder %s20, 7
    %p211 = por %p209, %p210
    %p212 = scmp.ne.s32.totalorder %s203, %s204
    %p213 = scmp.eq.s32.totalorder %s20, 0
    %p214 = por %p212, %p213
    %p215 = scmp.ne.s32.totalorder %s203, %s204
    %p216 = scmp.eq.s32.totalorder %s21, 7
    %p217 = por %p215, %p216
    %p219 = scmp.ne.s32.totalorder %s204, %s218
    %p220 = scmp.eq.s32.totalorder %s21, 0
    %p221 = por %p219, %p220
    %s222 = ssub.s32 %s15, %s22
    %p223 = scmp.eq.s32.totalorder %s222, 0
    %s225 = sadd.s32 %s224, 1
    %s226 = scalar_select %p223, %s224, %s225
    %p229 = pneg %p223
    %p230 = scmp.eq.s32.totalorder %s15, 7
    %p231 = por %p229, %p230
    %p232 = scmp.ne.s32.totalorder %s224, %s227
    %p233 = scmp.eq.s32.totalorder %s15, 0
    %p234 = por %p232, %p233
    %p235 = scmp.ne.s32.totalorder %s224, %s227
    %p236 = scmp.eq.s32.totalorder %s20, 7
    %p237 = por %p235, %p236
    %p238 = scmp.ne.s32.totalorder %s227, %s228
    %p239 = scmp.eq.s32.totalorder %s20, 0
    %p240 = por %p238, %p239
    %p241 = scmp.ne.s32.totalorder %s227, %s228
    %p242 = scmp.eq.s32.totalorder %s21, 7
    %p243 = por %p241, %p242
    %p245 = scmp.ne.s32.totalorder %s228, %s244
    %p246 = scmp.eq.s32.totalorder %s21, 0
    %p247 = por %p245, %p246
    %p248 = scmp.le.s32.totalorder 1, %s15
    %p249 = scmp.lt.s32.totalorder %s15, 9
    %p250 = pnand %p248, %p249
    %p251 = pneg %p250
    // Predicated region
    $region9: #{_ppo_forward.1} parent=5 // pred_check
      _
    $region10: #{_ppo_forward.1} parent=5 // pred_check_branch
      %253 = sbr.rel (%p250) target = $region12
    $region11: #{_ppo_forward.1} parent=5 // pred_region
      %s254 = ssub.s32 %s15, 1
      // Predicated region
      $region13: #{_ppo_forward.1} parent=11 // pred_check
        %p255 = pneg %p88
      $region14: #{_ppo_forward.1} parent=11 // pred_check_branch
        %257 = sbr.rel (%p255) target = $region16
      $region15: #{_ppo_forward.1} parent=11 // pred_region
        _
      $region16: #{_ppo_forward.1} parent=11 // pred_fallthru
        _
      // Predicated region
      $region17: #{_ppo_forward.1} parent=11 // pred_check
        %p258 = pneg %p109
      $region18: #{_ppo_forward.1} parent=11 // pred_check_branch
        %260 = sbr.rel (%p258) target = $region20
      $region19: #{_ppo_forward.1} parent=11 // pred_region
        _
      $region20: #{_ppo_forward.1} parent=11 // pred_fallthru
        _
      // Predicated region
      $region21: #{_ppo_forward.1} parent=11 // pred_check
        %p261 = pneg %p130
      $region22: #{_ppo_forward.1} parent=11 // pred_check_branch
        %263 = sbr.rel (%p261) target = $region24
      $region23: #{_ppo_forward.1} parent=11 // pred_region
        _
      $region24: #{_ppo_forward.1} parent=11 // pred_fallthru
        _
      // Predicated region
      $region25: #{_ppo_forward.1} parent=11 // pred_check
        %p264 = pneg %p151
      $region26: #{_ppo_forward.1} parent=11 // pred_check_branch
        %266 = sbr.rel (%p264) target = $region28
      $region27: #{_ppo_forward.1} parent=11 // pred_region
        _
      $region28: #{_ppo_forward.1} parent=11 // pred_fallthru
        _
      // Predicated region
      $region29: #{_ppo_forward.1} parent=11 // pred_check
        %p267 = pneg %p172
      $region30: #{_ppo_forward.1} parent=11 // pred_check_branch
        %269 = sbr.rel (%p267) target = $region32
      $region31: #{_ppo_forward.1} parent=11 // pred_region
        _
      $region32: #{_ppo_forward.1} parent=11 // pred_fallthru
        _
      // Predicated region
      $region33: #{_ppo_forward.1} parent=11 // pred_check
        %p270 = pneg %p193
      $region34: #{_ppo_forward.1} parent=11 // pred_check_branch
        %272 = sbr.rel (%p270) target = $region36
      $region35: #{_ppo_forward.1} parent=11 // pred_region
        _
      $region36: #{_ppo_forward.1} parent=11 // pred_fallthru
        _
      // Predicated region
      $region37: #{_ppo_forward.1} parent=11 // pred_check
        %p273 = pneg %p214
      $region38: #{_ppo_forward.1} parent=11 // pred_check_branch
        %275 = sbr.rel (%p273) target = $region40
      $region39: #{_ppo_forward.1} parent=11 // pred_region
        _
      $region40: #{_ppo_forward.1} parent=11 // pred_fallthru
        _
    $region12: #{_ppo_forward.1} parent=5 // pred_fallthru
      _
    %p276 = scmp.lt.s32.totalorder %s15, 8
    // Predicated region
    $region41: #{_ppo_forward.1} parent=5 // pred_check
      %p277 = pneg %p276
    $region42: #{_ppo_forward.1} parent=5 // pred_check_branch
      %279 = sbr.rel (%p277) target = $region44
    $region43: #{_ppo_forward.1} parent=5 // pred_region
      // Predicated region
      $region45: #{_ppo_forward.1} parent=43 // pred_check
        %p280 = pneg %p35
      $region46: #{_ppo_forward.1} parent=43 // pred_check_branch
        %282 = sbr.rel (%p280) target = $region48
      $region47: #{_ppo_forward.1} parent=43 // pred_region
        %s283 = smul.u32 8, %s15
        %p284 = scmp.lt.s32.totalorder %s283, 63
        %s285 = scalar_select %p284, %s283, 63
        %s286 = smul.addr %s285, 4
        %s287 = scalar_lea.vmem %s0, %s286
        %s288 = smul.u32 8, %s15
      $region48: #{_ppo_forward.1} parent=43 // pred_fallthru
        _
      // Predicated region
      $region49: #{_ppo_forward.1} parent=43 // pred_check
        %p289 = pneg %p61
      $region50: #{_ppo_forward.1} parent=43 // pred_check_branch
        %291 = sbr.rel (%p289) target = $region52
      $region51: #{_ppo_forward.1} parent=43 // pred_region
        %s292 = smul.u32 8, %s15
        %p293 = scmp.lt.s32.totalorder %s292, 63
        %s294 = scalar_select %p293, %s292, 63
        %s295 = smul.addr %s294, 8
        %s296 = scalar_lea.vmem %s1, %s295
        %s297 = smul.u32 8, %s15
      $region52: #{_ppo_forward.1} parent=43 // pred_fallthru
        _
    $region44: #{_ppo_forward.1} parent=5 // pred_fallthru
      _
    %p298 = scmp.le.s32.totalorder 1, %s15
    %p299 = scmp.lt.s32.totalorder %s15, 9
    %p300 = pnand %p298, %p299
    %p301 = pneg %p300
    // Predicated region
    $region53: #{_ppo_forward.1} parent=5 // pred_check
      _
    $region54: #{_ppo_forward.1} parent=5 // pred_check_branch
      %303 = sbr.rel (%p300) target = $region56
    $region55: #{_ppo_forward.1} parent=5 // pred_region
      %s304 = ssub.s32 %s15, 1
      %s305 = smul.u32 8, %s20
      %p306 = scmp.lt.s32.totalorder %s305, 63
      %s307 = scalar_select %p306, %s305, 63
      %s308 = smul.addr %s307, 4
      %s309 = scalar_lea.vmem %s0, %s308
      %p310 = pneg %p41
      %p311 = pneg %p38
      %s312 = smul.u32 8, %s20
      %p313 = scmp.lt.s32.totalorder %s312, 63
      %s314 = scalar_select %p313, %s312, 63
      %s315 = smul.addr %s314, 8
      %s316 = scalar_lea.vmem %s1, %s315
      %p317 = pneg %p67
      %p318 = pneg %p64
      %p319 = pneg %p88
      %p320 = pneg %p85
      %p321 = pneg %p109
      %p322 = pneg %p106
      %p323 = pneg %p130
      %p324 = pneg %p127
      %p325 = pneg %p151
      %p326 = pneg %p148
      %p327 = pneg %p172
      %p328 = pneg %p169
      %p329 = pneg %p193
      %p330 = pneg %p190
      %p331 = pneg %p214
      %p332 = pneg %p211
      %p333 = pneg %p240
      %p334 = pneg %p237
      %s335 = smul.u32 8, %s20
      %p336 = scmp.lt.s32.totalorder %s335, 63
      %s337 = scalar_select %p336, %s335, 63
      %s338 = smul.addr %s337, 8
      %s339 = scalar_lea.vmem %s9, %s338
      %s340 = smul.u32 8, %s20
      %p341 = scmp.lt.s32.totalorder %s340, 63
      %s342 = scalar_select %p341, %s340, 63
      %s343 = smul.addr %s342, 4
      %s344 = scalar_lea.vmem %s0, %s343
      %s345 = smul.u32 8, %s20
      %s346 = smul.u32 8, %s20
      %p347 = scmp.lt.s32.totalorder %s346, 63
      %s348 = scalar_select %p347, %s346, 63
      %s349 = smul.addr %s348, 8
      %s350 = scalar_lea.vmem %s1, %s349
      %s351 = smul.u32 8, %s20
      %s352 = smul.u32 8, %s20
      %p353 = scmp.lt.s32.totalorder %s352, 63
      %s354 = scalar_select %p353, %s352, 63
      %s355 = smul.addr %s354, 8
      %s356 = scalar_lea.vmem %s9, %s355
      %s357 = smul.u32 8, %s20
      %v359 = vld [vmem:[%s344] sm:$0xf]
      %v360 = vld [vmem:[%s344 + $0x4] sm:$0xf]
      %v361 = vld [vmem:[%s344 + $0x8] sm:$0xf]
      %v362 = vld [vmem:[%s344 + $0xc] sm:$0xf]
      %v363 = vld [vmem:[%s344 + $0x10] sm:$0xf]
      %v364 = vld [vmem:[%s344 + $0x14] sm:$0xf]
      %v365 = vld [vmem:[%s344 + $0x18] sm:$0xf]
      %v366 = vld [vmem:[%s344 + $0x1c] sm:$0xf]
      %v367 = vld [vmem:[%s2] sm:$0xf]
      %v368 = vld [vmem:[%s3] sm:$0x1]
      %v370 = vlaneseq
      %v371 = vshrl.u32 %v370, 7
      %v372 = vsub.s32 0, %v371
      %v373 = vrot.slane %v368, %v372
      %v383 = vunpack.c.l.b16 %v359
      %v384 = vunpack.c.l.b16 %v360
      %v385 = vunpack.c.l.b16 %v361
      %v386 = vunpack.c.l.b16 %v362
      %v387 = vunpack.c.l.b16 %v363
      %v388 = vunpack.c.l.b16 %v364
      %v389 = vunpack.c.l.b16 %v365
      %v390 = vunpack.c.l.b16 %v366
      %v391 = vpack.c.b16 %v384, %v383
      %v392 = vpack.c.b16 %v386, %v385
      %v393 = vpack.c.b16 %v388, %v387
      %v394 = vpack.c.b16 %v390, %v389
      %vm395 = vcmask 64512
      %v397 = vsel %vm395, %v391, 0
      %v400 = vsel %vm395, %v392, 0
      %v403 = vsel %vm395, %v393, 0
      %v406 = vsel %vm395, %v394, 0
      %vm408 = vcmask 1043456
      %v410 = vsel %vm408, %v367, 0
      %412 = vmatprep.subr.bf16.mxu0 0
      %413 = vmatpush1.bf16.msra.mxu0 0
      %414 = vmatprep.subr.bf16.mxu0 0
      %415 = vmatpush1.bf16.msra.mxu0 0
      %416 = vmatprep.subr.bf16.mxu0 0
      %417 = vmatpush1.bf16.msra.mxu0 0
      %418 = vmatprep.subr.bf16.mxu0 0
      %419 = vmatpush1.bf16.msra.mxu0 0
      %420 = vmatprep.subr.bf16.mxu0 0
      %421 = vmatpush1.bf16.msra.mxu0 0
      %422 = vmatprep.subr.bf16.mxu0 0
      %423 = vmatpush1.bf16.msra.mxu0 0
      %424 = vmatprep.subr.bf16.mxu0 0
      %425 = vmatpush1.bf16.msra.mxu0 0
      %426 = vmatprep.subr.bf16.mxu0 0
      %427 = vmatpush1.bf16.msra.mxu0 %v410
      %428 = vmatprep.subr.bf16.mxu0 0
      %429 = vmatpush2.bf16.msra.mxu0 0
      %430 = vmatprep.subr.bf16.mxu0 0
      %431 = vmatpush2.bf16.msra.mxu0 0
      %432 = vmatprep.subr.bf16.mxu0 0
      %433 = vmatpush2.bf16.msra.mxu0 0
      %434 = vmatprep.subr.bf16.mxu0 0
      %435 = vmatpush2.bf16.msra.mxu0 0
      %436 = vmatprep.subr.bf16.mxu0 0
      %437 = vmatpush2.bf16.msra.mxu0 0
      %438 = vmatprep.subr.bf16.mxu0 0
      %439 = vmatpush2.bf16.msra.mxu0 0
      %440 = vmatprep.subr.bf16.mxu0 0
      %441 = vmatpush2.bf16.msra.mxu0 0
      %442 = vmatprep.subr.bf16.mxu0 0
      %443 = vmatpush2.bf16.msra.mxu0 0
      %444 = vmatprep.mubr.bf16.mxu0 0
      %445 = vmatmul.mubr.bf16.gmra.mxu0 %v397
      %v446 = vpop.f32.mrf.mxu0
      %v447 = vadd.f32 %v373, %v446
      %v448 = vpop.f32.mrf.mxu0
      %v449 = vpop.f32.mrf.mxu0
      %v450 = vadd.f32 %v373, %v449
      %v451 = vpop.f32.mrf.mxu0
      %452 = vmatprep.mubr.bf16.mxu0 0
      %453 = vmatmul.mubr.bf16.gmra.mxu0 %v400
      %v454 = vpop.f32.mrf.mxu0
      %v455 = vadd.f32 %v373, %v454
      %v456 = vpop.f32.mrf.mxu0
      %v457 = vpop.f32.mrf.mxu0
      %v458 = vadd.f32 %v373, %v457
      %v459 = vpop.f32.mrf.mxu0
      %460 = vmatprep.mubr.bf16.mxu0 0
      %461 = vmatmul.mubr.bf16.gmra.mxu0 %v403
      %v462 = vpop.f32.mrf.mxu0
      %v463 = vadd.f32 %v373, %v462
      %v464 = vpop.f32.mrf.mxu0
      %v465 = vpop.f32.mrf.mxu0
      %v466 = vadd.f32 %v373, %v465
      %v467 = vpop.f32.mrf.mxu0
      %468 = vmatprep.mubr.bf16.mxu0 0
      %469 = vmatmul.mubr.bf16.gmra.mxu0 %v406
      %v470 = vpop.f32.mrf.mxu0
      %v471 = vadd.f32 %v373, %v470
      %v472 = vpop.f32.mrf.mxu0
      %v473 = vpop.f32.mrf.mxu0
      %v474 = vadd.f32 %v373, %v473
      %v475 = vpop.f32.mrf.mxu0
      %476 = vdwg.mxu0
      %v477 = vpack.c.bf16 %v450, %v447
      %v478 = vpack.c.bf16 %v458, %v455
      %v479 = vpack.c.bf16 %v466, %v463
      %v480 = vpack.c.bf16 %v474, %v471
      %v481 = vtanh.bf16.pop %v477
      %v482 = vtanh.bf16.pop %v478
      %v483 = vtanh.bf16.pop %v479
      %v484 = vtanh.bf16.pop %v480
      %v485 = vld [vmem:[%s4] sm:$0xf]
      %v486 = vld [vmem:[%s4 + $0x4] sm:$0xf]
      %v487 = vld [vmem:[%s4 + $0x8] sm:$0xf]
      %v488 = vld [vmem:[%s4 + $0xc] sm:$0xf]
      %v489 = vld [vmem:[%s4 + $0x10] sm:$0xf]
      %v490 = vld [vmem:[%s4 + $0x14] sm:$0xf]
      %v491 = vld [vmem:[%s4 + $0x18] sm:$0xf]
      %v492 = vld [vmem:[%s4 + $0x1c] sm:$0xf]
      %v493 = vld [vmem:[%s5] sm:$0x1]
      %v495 = vlaneseq
      %v496 = vshrl.u32 %v495, 7
      %v497 = vsub.s32 0, %v496
      %v498 = vrot.slane %v493, %v497
      %v508 = vunpack.c.l.b16 %v485
      %v509 = vunpack.c.l.b16 %v486
      %v510 = vunpack.c.l.b16 %v487
      %v511 = vunpack.c.l.b16 %v488
      %v512 = vunpack.c.l.b16 %v489
      %v513 = vunpack.c.l.b16 %v490
      %v514 = vunpack.c.l.b16 %v491
      %v515 = vunpack.c.l.b16 %v492
      %v516 = vpack.c.b16 %v509, %v508
      %v517 = vpack.c.b16 %v511, %v510
      %v518 = vpack.c.b16 %v513, %v512
      %v519 = vpack.c.b16 %v515, %v514
      %vm524 = vcmask 523264
      %v526 = vsel %vm524, %v481, 0
      %v529 = vsel %vm524, %v482, 0
      %v532 = vsel %vm524, %v483, 0
      %v535 = vsel %vm524, %v484, 0
      %537 = vmatprep.subr.bf16.mxu0 0
      %538 = vmatpush1.bf16.msra.mxu0 0
      %539 = vmatprep.subr.bf16.mxu0 0
      %540 = vmatpush1.bf16.msra.mxu0 0
      %541 = vmatprep.subr.bf16.mxu0 0
      %542 = vmatpush1.bf16.msra.mxu0 0
      %543 = vmatprep.subr.bf16.mxu0 0
      %544 = vmatpush1.bf16.msra.mxu0 0
      %545 = vmatprep.subr.bf16.mxu0 0
      %546 = vmatpush1.bf16.msra.mxu0 %v519
      %547 = vmatprep.subr.bf16.mxu0 0
      %548 = vmatpush1.bf16.msra.mxu0 %v518
      %549 = vmatprep.subr.bf16.mxu0 0
      %550 = vmatpush1.bf16.msra.mxu0 %v517
      %551 = vmatprep.subr.bf16.mxu0 0
      %552 = vmatpush1.bf16.msra.mxu0 %v516
      %553 = vmatprep.subr.bf16.mxu0 0
      %554 = vmatpush2.bf16.msra.mxu0 0
      %555 = vmatprep.subr.bf16.mxu0 0
      %556 = vmatpush2.bf16.msra.mxu0 0
      %557 = vmatprep.subr.bf16.mxu0 0
      %558 = vmatpush2.bf16.msra.mxu0 0
      %559 = vmatprep.subr.bf16.mxu0 0
      %560 = vmatpush2.bf16.msra.mxu0 0
      %561 = vmatprep.subr.bf16.mxu0 0
      %562 = vmatpush2.bf16.msra.mxu0 0
      %563 = vmatprep.subr.bf16.mxu0 0
      %564 = vmatpush2.bf16.msra.mxu0 0
      %565 = vmatprep.subr.bf16.mxu0 0
      %566 = vmatpush2.bf16.msra.mxu0 0
      %567 = vmatprep.subr.bf16.mxu0 0
      %568 = vmatpush2.bf16.msra.mxu0 0
      %569 = vmatprep.mubr.bf16.mxu0 0
      %570 = vmatmul.mubr.bf16.gmra.mxu0 %v526
      %v571 = vpop.f32.mrf.mxu0
      %v572 = vadd.f32 %v498, %v571
      %v573 = vpop.f32.mrf.mxu0
      %v574 = vpop.f32.mrf.mxu0
      %v575 = vadd.f32 %v498, %v574
      %v576 = vpop.f32.mrf.mxu0
      %577 = vmatprep.mubr.bf16.mxu0 0
      %578 = vmatmul.mubr.bf16.gmra.mxu0 %v529
      %v579 = vpop.f32.mrf.mxu0
      %v580 = vadd.f32 %v498, %v579
      %v581 = vpop.f32.mrf.mxu0
      %v582 = vpop.f32.mrf.mxu0
      %v583 = vadd.f32 %v498, %v582
      %v584 = vpop.f32.mrf.mxu0
      %585 = vmatprep.mubr.bf16.mxu0 0
      %586 = vmatmul.mubr.bf16.gmra.mxu0 %v532
      %v587 = vpop.f32.mrf.mxu0
      %v588 = vadd.f32 %v498, %v587
      %v589 = vpop.f32.mrf.mxu0
      %v590 = vpop.f32.mrf.mxu0
      %v591 = vadd.f32 %v498, %v590
      %v592 = vpop.f32.mrf.mxu0
      %593 = vmatprep.mubr.bf16.mxu0 0
      %594 = vmatmul.mubr.bf16.gmra.mxu0 %v535
      %v595 = vpop.f32.mrf.mxu0
      %v596 = vadd.f32 %v498, %v595
      %v597 = vpop.f32.mrf.mxu0
      %v598 = vpop.f32.mrf.mxu0
      %v599 = vadd.f32 %v498, %v598
      %v600 = vpop.f32.mrf.mxu0
      %601 = vdwg.mxu0
      %v602 = vpack.c.bf16 %v575, %v572
      %v603 = vpack.c.bf16 %v583, %v580
      %v604 = vpack.c.bf16 %v591, %v588
      %v605 = vpack.c.bf16 %v599, %v596
      %v606 = vtanh.bf16.pop %v602
      %v607 = vtanh.bf16.pop %v603
      %v608 = vtanh.bf16.pop %v604
      %v609 = vtanh.bf16.pop %v605
      %v610 = vld [vmem:[%s6] sm:$0xf]
      %v611 = vld [vmem:[%s6 + $0x4] sm:$0xf]
      %v612 = vld [vmem:[%s6 + $0x8] sm:$0xf]
      %v613 = vld [vmem:[%s6 + $0xc] sm:$0xf]
      %v614 = vld [vmem:[%s6 + $0x10] sm:$0xf]
      %v615 = vld [vmem:[%s6 + $0x14] sm:$0xf]
      %v616 = vld [vmem:[%s6 + $0x18] sm:$0xf]
      %v617 = vld [vmem:[%s6 + $0x1c] sm:$0xf]
      %v618 = vld [vmem:[%s7] sm:$0x1]
      %v620 = vlaneseq
      %v621 = vshrl.u32 %v620, 7
      %v622 = vsub.s32 0, %v621
      %v623 = vrot.slane %v618, %v622
      %v633 = vunpack.c.l.b16 %v610
      %v634 = vunpack.c.l.b16 %v611
      %v635 = vunpack.c.l.b16 %v612
      %v636 = vunpack.c.l.b16 %v613
      %v637 = vunpack.c.l.b16 %v614
      %v638 = vunpack.c.l.b16 %v615
      %v639 = vunpack.c.l.b16 %v616
      %v640 = vunpack.c.l.b16 %v617
      %v641 = vpack.c.b16 %v634, %v633
      %v642 = vpack.c.b16 %v636, %v635
      %v643 = vpack.c.b16 %v638, %v637
      %v644 = vpack.c.b16 %v640, %v639
      %v650 = vsel %vm524, %v606, 0
      %v653 = vsel %vm524, %v607, 0
      %v656 = vsel %vm524, %v608, 0
      %v659 = vsel %vm524, %v609, 0
      %661 = vmatprep.subr.bf16.mxu0 0
      %662 = vmatpush1.bf16.msra.mxu0 0
      %663 = vmatprep.subr.bf16.mxu0 0
      %664 = vmatpush1.bf16.msra.mxu0 0
      %665 = vmatprep.subr.bf16.mxu0 0
      %666 = vmatpush1.bf16.msra.mxu0 0
      %667 = vmatprep.subr.bf16.mxu0 0
      %668 = vmatpush1.bf16.msra.mxu0 0
      %669 = vmatprep.subr.bf16.mxu0 0
      %670 = vmatpush1.bf16.msra.mxu0 %v644
      %671 = vmatprep.subr.bf16.mxu0 0
      %672 = vmatpush1.bf16.msra.mxu0 %v643
      %673 = vmatprep.subr.bf16.mxu0 0
      %674 = vmatpush1.bf16.msra.mxu0 %v642
      %675 = vmatprep.subr.bf16.mxu0 0
      %676 = vmatpush1.bf16.msra.mxu0 %v641
      %677 = vmatprep.subr.bf16.mxu0 0
      %678 = vmatpush2.bf16.msra.mxu0 0
      %679 = vmatprep.subr.bf16.mxu0 0
      %680 = vmatpush2.bf16.msra.mxu0 0
      %681 = vmatprep.subr.bf16.mxu0 0
      %682 = vmatpush2.bf16.msra.mxu0 0
      %683 = vmatprep.subr.bf16.mxu0 0
      %684 = vmatpush2.bf16.msra.mxu0 0
      %685 = vmatprep.subr.bf16.mxu0 0
      %686 = vmatpush2.bf16.msra.mxu0 0
      %687 = vmatprep.subr.bf16.mxu0 0
      %688 = vmatpush2.bf16.msra.mxu0 0
      %689 = vmatprep.subr.bf16.mxu0 0
      %690 = vmatpush2.bf16.msra.mxu0 0
      %691 = vmatprep.subr.bf16.mxu0 0
      %692 = vmatpush2.bf16.msra.mxu0 0
      %693 = vmatprep.mubr.bf16.mxu0 0
      %694 = vmatmul.mubr.bf16.gmra.mxu0 %v650
      %v695 = vpop.f32.mrf.mxu0
      %v696 = vadd.f32 %v623, %v695
      %v697 = vpop.f32.mrf.mxu0
      %v698 = vpop.f32.mrf.mxu0
      %v699 = vadd.f32 %v623, %v698
      %v700 = vpop.f32.mrf.mxu0
      %701 = vmatprep.mubr.bf16.mxu0 0
      %702 = vmatmul.mubr.bf16.gmra.mxu0 %v653
      %v703 = vpop.f32.mrf.mxu0
      %v704 = vadd.f32 %v623, %v703
      %v705 = vpop.f32.mrf.mxu0
      %v706 = vpop.f32.mrf.mxu0
      %v707 = vadd.f32 %v623, %v706
      %v708 = vpop.f32.mrf.mxu0
      %709 = vmatprep.mubr.bf16.mxu0 0
      %710 = vmatmul.mubr.bf16.gmra.mxu0 %v656
      %v711 = vpop.f32.mrf.mxu0
      %v712 = vadd.f32 %v623, %v711
      %v713 = vpop.f32.mrf.mxu0
      %v714 = vpop.f32.mrf.mxu0
      %v715 = vadd.f32 %v623, %v714
      %v716 = vpop.f32.mrf.mxu0
      %717 = vmatprep.mubr.bf16.mxu0 0
      %718 = vmatmul.mubr.bf16.gmra.mxu0 %v659
      %v719 = vpop.f32.mrf.mxu0
      %v720 = vadd.f32 %v623, %v719
      %v721 = vpop.f32.mrf.mxu0
      %v722 = vpop.f32.mrf.mxu0
      %v723 = vadd.f32 %v623, %v722
      %v724 = vpop.f32.mrf.mxu0
      %725 = vdwg.mxu0
      %v726 = vld [vmem:[%s350] sm:$0xff]
      %v727 = vld [vmem:[%s350 + $0x8] sm:$0xff]
      %v728 = vld [vmem:[%s350 + $0x10] sm:$0xff]
      %v729 = vld [vmem:[%s350 + $0x18] sm:$0xff]
      %v730 = vld [vmem:[%s350 + $0x20] sm:$0xff]
      %v731 = vld [vmem:[%s350 + $0x28] sm:$0xff]
      %v732 = vld [vmem:[%s350 + $0x30] sm:$0xff]
      %v733 = vld [vmem:[%s350 + $0x38] sm:$0xff]
      %742 = vrot.lane.b32.xlu0 %v696, 126
      %v743 = vpop.permute.xlu0 %742
      %744 = vrot.lane.b32.xlu0 %v699, 126
      %v745 = vpop.permute.xlu0 %744
      %746 = vrot.lane.b32.xlu0 %v704, 126
      %v747 = vpop.permute.xlu0 %746
      %748 = vrot.lane.b32.xlu0 %v707, 126
      %v749 = vpop.permute.xlu0 %748
      %750 = vrot.lane.b32.xlu0 %v712, 126
      %v751 = vpop.permute.xlu0 %750
      %752 = vrot.lane.b32.xlu0 %v715, 126
      %v753 = vpop.permute.xlu0 %752
      %754 = vrot.lane.b32.xlu0 %v720, 126
      %v755 = vpop.permute.xlu0 %754
      %756 = vrot.lane.b32.xlu0 %v723, 126
      %v757 = vpop.permute.xlu0 %756
      %v766 = vsub.f32 %v726, %v743
      %v767 = vsub.f32 %v727, %v745
      %v768 = vsub.f32 %v728, %v747
      %v769 = vsub.f32 %v729, %v749
      %v770 = vsub.f32 %v730, %v751
      %v771 = vsub.f32 %v731, %v753
      %v772 = vsub.f32 %v732, %v755
      %v773 = vsub.f32 %v733, %v757
      %v774 = vmul.f32 %v766, %v766
      %v775 = vmul.f32 %v767, %v767
      %v776 = vmul.f32 %v768, %v768
      %v777 = vmul.f32 %v769, %v769
      %v778 = vmul.f32 %v770, %v770
      %v779 = vmul.f32 %v771, %v771
      %v780 = vmul.f32 %v772, %v772
      %v781 = vmul.f32 %v773, %v773
      %v782 = vld [vmem:[%s8] sm:$0x1]
      %v784 = vlaneseq
      %v785 = vshrl.u32 %v784, 7
      %v786 = vsub.s32 0, %v785
      %v787 = vrot.slane %v782, %v786
      %v789 = vmul.f32 %v774, %v787
      %v790 = vmul.f32 %v775, %v787
      %v791 = vmul.f32 %v776, %v787
      %v792 = vmul.f32 %v777, %v787
      %v793 = vmul.f32 %v778, %v787
      %v794 = vmul.f32 %v779, %v787
      %v795 = vmul.f32 %v780, %v787
      %v796 = vmul.f32 %v781, %v787
      %vm797 = vcmask 31744
      %v798 = vsel %vm797, %v789, 0.0
      %799 = vadd.xlane.f32.xlu0 %v798
      %v800 = vpop.xlane.xlu0 %799
      %v801 = vsel %vm797, %v790, 0.0
      %802 = vadd.xlane.f32.xlu0 %v801
      %v803 = vpop.xlane.xlu0 %802
      %v804 = vsel %vm797, %v791, 0.0
      %805 = vadd.xlane.f32.xlu0 %v804
      %v806 = vpop.xlane.xlu0 %805
      %v807 = vsel %vm797, %v792, 0.0
      %808 = vadd.xlane.f32.xlu0 %v807
      %v809 = vpop.xlane.xlu0 %808
      %v810 = vsel %vm797, %v793, 0.0
      %811 = vadd.xlane.f32.xlu0 %v810
      %v812 = vpop.xlane.xlu0 %811
      %v813 = vsel %vm797, %v794, 0.0
      %814 = vadd.xlane.f32.xlu0 %v813
      %v815 = vpop.xlane.xlu0 %814
      %v816 = vsel %vm797, %v795, 0.0
      %817 = vadd.xlane.f32.xlu0 %v816
      %v818 = vpop.xlane.xlu0 %817
      %v819 = vsel %vm797, %v796, 0.0
      %820 = vadd.xlane.f32.xlu0 %v819
      %v821 = vpop.xlane.xlu0 %820
      %v822 = vlaneseq
      %v823 = vand.u32 %v822, 127
      %vm824 = vcmp.eq.s32.totalorder %v823, 0
      %v825 = vsel %vm824, %v800, %v696
      %v826 = vsel %vm824, %v803, %v699
      %v827 = vsel %vm824, %v806, %v704
      %v828 = vsel %vm824, %v809, %v707
      %v829 = vsel %vm824, %v812, %v712
      %v830 = vsel %vm824, %v815, %v715
      %v831 = vsel %vm824, %v818, %v720
      %v832 = vsel %vm824, %v821, %v723
      %833 = vst.msk [vmem:[%s356] sm:$0xff] %vm395, %v825
      %834 = vst.msk [vmem:[%s356 + $0x8] sm:$0xff] %vm395, %v826
      %835 = vst.msk [vmem:[%s356 + $0x10] sm:$0xff] %vm395, %v827
      %836 = vst.msk [vmem:[%s356 + $0x18] sm:$0xff] %vm395, %v828
      %837 = vst.msk [vmem:[%s356 + $0x20] sm:$0xff] %vm395, %v829
      %838 = vst.msk [vmem:[%s356 + $0x28] sm:$0xff] %vm395, %v830
      %839 = vst.msk [vmem:[%s356 + $0x30] sm:$0xff] %vm395, %v831
      %840 = vst.msk [vmem:[%s356 + $0x38] sm:$0xff] %vm395, %v832
      %s841 = smul.u32 8, %s20
      %p842 = scmp.lt.s32.totalorder %s841, 63
      %s843 = scalar_select %p842, %s841, 63
      %s844 = smul.addr %s843, 8
      %s845 = scalar_lea.vmem %s9, %s844
      // Predicated region
      $region57: #{_ppo_forward.1} parent=55 // pred_check
        %p846 = pneg %p237
      $region58: #{_ppo_forward.1} parent=55 // pred_check_branch
        %848 = sbr.rel (%p846) target = $region60
      $region59: #{_ppo_forward.1} parent=55 // pred_region
        %s849 = smul.u32 8, %s20
      $region60: #{_ppo_forward.1} parent=55 // pred_fallthru
        _
    $region56: #{_ppo_forward.1} parent=5 // pred_fallthru
      _
    %p850 = scmp.le.s32.totalorder 2, %s15
    // Predicated region
    $region61: #{_ppo_forward.1} parent=5 // pred_check
      %p851 = pneg %p850
    $region62: #{_ppo_forward.1} parent=5 // pred_check_branch
      %853 = sbr.rel (%p851) target = $region64
    $region63: #{_ppo_forward.1} parent=5 // pred_region
      %s854 = ssub.s32 %s15, 2
      // Predicated region
      $region65: #{_ppo_forward.1} parent=63 // pred_check
        %p855 = pneg %p243
      $region66: #{_ppo_forward.1} parent=63 // pred_check_branch
        %857 = sbr.rel (%p855) target = $region68
      $region67: #{_ppo_forward.1} parent=63 // pred_region
        %s858 = smul.u32 8, %s21
        %p859 = scmp.lt.s32.totalorder %s858, 63
        %s860 = scalar_select %p859, %s858, 63
        %s861 = smul.addr %s860, 8
        %s862 = scalar_lea.vmem %s9, %s861
      $region68: #{_ppo_forward.1} parent=63 // pred_fallthru
        _
    $region64: #{_ppo_forward.1} parent=5 // pred_fallthru
      _
  $region6: #{_ppo_forward.1} parent=0 // loop_footer
    %s19 = sadd.s32 1, %s15
  $region7: #{_ppo_forward.1} parent=0 // loop_footer_branch
    %14 = sbr.rel target = $region3
  $region8: #{_ppo_forward.1} parent=0 // loop_exit
    _

</llo_original>
